<compile_context>
chip_gen: v7x
topology: tpu7x:2x2x1
jax: 0.10.0
libtpu: 0.0.40
codegen_flags: <defaults>
</compile_context>

<pallas_src>
import functools
import math

import jax
import jax.numpy as jnp
from jax.experimental import pallas as pl
from jax.experimental.pallas import tpu as pltpu


FCC_LIST = (16, 32, 16, 8)
NUM_INPUTS = 2
NUM_OUTPUTS = 1
NUM_LAYERS = len(FCC_LIST) + 1
MAXF = 32                      # max feature width across all layers (pad target)


def _mlp_kernel(x_ref, w_ref, b_ref, o_ref, *, apply_sigmoid, chunk):
    """Whole MLP on one batch tile, batch on lanes, chunked along lanes.

    x_ref: (NUM_INPUTS, TB)      w_ref: (NUM_LAYERS, 32, 32)  (zero padded)
    b_ref: (NUM_LAYERS, 32, 1)   o_ref: (NUM_OUTPUTS, TB)
    """
    f32 = jnp.float32
    tb = x_ref.shape[1]
    num_chunks = tb // chunk
    F1, F2, F3, F4 = FCC_LIST                       # 16, 32, 16, 8

    # Loop-invariant, lane-dense parameter operands (hoisted once per grid
    # step; JAX does not CSE broadcast_in_dim, so do it explicitly here).
    w1a = jnp.broadcast_to(w_ref[0, :F1, 0:1], (F1, chunk)).astype(f32)
    w1b = jnp.broadcast_to(w_ref[0, :F1, 1:2], (F1, chunk)).astype(f32)
    b1 = jnp.broadcast_to(b_ref[0, :F1, :], (F1, chunk)).astype(f32)
    w2 = w_ref[1, :F2, :F1].astype(f32)             # (32, 16)
    b2 = jnp.broadcast_to(b_ref[1, :F2, :], (F2, chunk)).astype(f32)
    w3 = w_ref[2, :F3, :F2].astype(f32)             # (16, 32)
    b3 = jnp.broadcast_to(b_ref[2, :F3, :], (F3, chunk)).astype(f32)
    w4 = w_ref[3, :F4, :F3].astype(f32)             # (8, 16)
    b4 = jnp.broadcast_to(b_ref[3, :F4, :], (F4, chunk)).astype(f32)
    w5 = jnp.broadcast_to(w_ref[4, :F4, 0:1], (F4, chunk)).astype(f32)   # W5^T
    b5 = jnp.broadcast_to(b_ref[4, 0:1, :], (1, chunk)).astype(f32)

    @pl.loop(0, num_chunks)
    def _(c):
        start = pl.multiple_of(c * chunk, chunk)
        xc = x_ref[:, pl.ds(start, chunk)].astype(f32)          # (2, chunk)

        # layer 1 (2 -> 16): K=2 is degenerate for the MXU -> two VPU MACs.
        h = jnp.maximum(w1a * xc[0:1, :] + w1b * xc[1:2, :] + b1, 0.0)

        # layers 2..4 (16->32->16->8): MXU matmuls at true layer widths.
        h = jnp.maximum(jnp.dot(w2, h, preferred_element_type=f32) + b2, 0.0)
        h = jnp.maximum(jnp.dot(w3, h, preferred_element_type=f32) + b3, 0.0)
        h = jnp.maximum(jnp.dot(w4, h, preferred_element_type=f32) + b4, 0.0)

        # layer 5 (8 -> 1): VPU multiply + sublane (XLU) reduction.
        y = jnp.sum(h * w5, axis=0, keepdims=True) + b5         # (1, chunk)

        if apply_sigmoid:
            # exp and the approximate reciprocal both run on the EUP.
            y = pl.reciprocal(1.0 + jnp.exp(-y), approx=True)

        o_ref[:, pl.ds(start, chunk)] = y.astype(o_ref.dtype)


def pack_params(params):
    """Zero-pad all layer weights/biases into two VMEM-friendly operands.

    params: list of (W, b) in PyTorch nn.Linear layout, W: (out, in), b: (out,).
    The last layer is stored transposed (as an (in, 1) column) so the kernel
    can do a VPU weighted sum over sublanes instead of an MXU matmul.
    """
    wpack = jnp.zeros((NUM_LAYERS, MAXF, MAXF), jnp.float32)
    bpack = jnp.zeros((NUM_LAYERS, MAXF, 1), jnp.float32)
    for layer, (w, b) in enumerate(params):
        out_f, in_f = w.shape
        if layer == NUM_LAYERS - 1:
            wpack = wpack.at[layer, :in_f, :out_f].set(w.astype(jnp.float32).T)
        else:
            wpack = wpack.at[layer, :out_f, :in_f].set(w.astype(jnp.float32))
        bpack = bpack.at[layer, :out_f, 0].set(b.astype(jnp.float32))
    return wpack, bpack


def collate_model_forward(x, params, *, tile_b=None, sigmoid=True,
                          feature_major=False):
    """Forward pass of CollateModel.

    x: (N, 2) batch-major (PyTorch layout) or, with feature_major=True, (2, N).
       The feature-major path is the fast path: it avoids an extra HBM
       round trip for the wrapper-side transpose.  bf16 input is allowed and
       upcast in-kernel (halves input HBM bytes; useful on v5e).
    params: list of (W, b), W shaped (out, in), b shaped (out,) (PyTorch layout).
    """
    if feature_major:
        ni, n = x.shape
        xt = x
    else:
        n, ni = x.shape
        # NOTE: this transpose is a separate XLA op (extra HBM traffic);
        # prefer feeding feature-major (2, N) data from the producer.
        xt = x.T
    assert ni == NUM_INPUTS

    if tile_b is None:
        # Target ~8 grid steps (amortizes ~0.35us/step overhead, keeps >=2
        # parallel steps for v7x's 2 TensorCores), capped at 32K lanes; per-step
        # I/O VMEM stays in the low-hundreds-of-KiB range at the cap.
        tile_b = pl.next_power_of_2(max(1, pl.cdiv(n, 8)))
        tile_b = max(512, min(32768, tile_b))
    assert tile_b >= 128 and tile_b % 128 == 0, (
        "tile_b must be a positive multiple of 128 (lane-dense blocks)")
    # Inner register-resident chunk along the lane axis (<=256 lanes keeps the
    # whole layer chain plus hoisted parameter broadcasts within ~48 vregs).
    chunk = math.gcd(tile_b, 256)

    if xt.dtype not in (jnp.float32, jnp.bfloat16):
        xt = xt.astype(jnp.float32)

    # Ragged batches: pad to a tile multiple (padded compute is discarded).
    n_pad = pl.cdiv(n, tile_b) * tile_b
    if n_pad != n:
        xt = jnp.pad(xt, ((0, 0), (0, n_pad - n)))

    wpack, bpack = pack_params(params)

    grid = (n_pad // tile_b,)
    out = pl.pallas_call(
        functools.partial(_mlp_kernel, apply_sigmoid=sigmoid, chunk=chunk),
        out_shape=jax.ShapeDtypeStruct((NUM_OUTPUTS, n_pad), jnp.float32),
        grid_spec=pltpu.PrefetchScalarGridSpec(
            num_scalar_prefetch=0,
            grid=grid,
            in_specs=[
                pl.BlockSpec((NUM_INPUTS, tile_b), lambda i: (0, i)),
                pl.BlockSpec((NUM_LAYERS, MAXF, MAXF), lambda i: (0, 0, 0)),
                pl.BlockSpec((NUM_LAYERS, MAXF, 1), lambda i: (0, 0, 0)),
            ],
            out_specs=pl.BlockSpec((NUM_OUTPUTS, tile_b), lambda i: (0, i)),
        ),
        compiler_params=pltpu.CompilerParams(
            dimension_semantics=("parallel",)),
    )(xt, wpack, bpack)

    out = out[:, :n]
    if NUM_OUTPUTS == 1:
        out = jnp.reshape(out, (-1,))       # torch.flatten equivalent
    return out


def init_params(key):
    """Deterministic init mimicking nn.Linear's default U(-1/sqrt(fan_in), ...)."""
    dims = (NUM_INPUTS,) + FCC_LIST + (NUM_OUTPUTS,)
    params = []
    for k in range(len(dims) - 1):
        fan_in, fan_out = dims[k], dims[k + 1]
        key, kw, kb = jax.random.split(key, 3)
        bound = 1.0 / float(fan_in) ** 0.5
        w = jax.random.uniform(kw, (fan_out, fan_in), jnp.float32, -bound, bound)
        b = jax.random.uniform(kb, (fan_out,), jnp.float32, -bound, bound)
        params.append((w, b))
    return params


def reference_forward(x, params, sigmoid=True):
    """Pure-JAX reference replicating the PyTorch module (inference mode)."""
    h = x.astype(jnp.float32)
    for k, (w, b) in enumerate(params):
        h = h @ w.T + b
        if k < len(params) - 1:
            h = jnp.maximum(h, 0.0)
    if sigmoid:
        h = jax.nn.sigmoid(h)
    if NUM_OUTPUTS == 1:
        h = jnp.reshape(h, (-1,))
    return h


if __name__ == "__main__":
    key = jax.random.PRNGKey(0)
    key, kx = jax.random.split(key)

    batch = 300          # deliberately NOT a multiple of the tile -> ragged-tail path
    # Feature-major (2, N) input: the fast path (no wrapper transpose).
    x_fm = jax.random.normal(kx, (NUM_INPUTS, batch), dtype=jnp.float32)

    params = init_params(key)

    out = collate_model_forward(x_fm, params, sigmoid=True, feature_major=True)
    out = jax.block_until_ready(out)

    ref = reference_forward(x_fm.T, params, sigmoid=True)

    # sanity: flattened output, one sigmoid value per sample, matches reference
    # (loose tolerance because the sigmoid uses the approximate EUP reciprocal).
    assert out.shape == (batch,)
    assert bool(jnp.all((out >= 0.0) & (out <= 1.0)))
    assert bool(jnp.max(jnp.abs(out - ref)) < 1e-2)

    # also exercise the PyTorch-layout (batch-major) compatibility path once.
    out2 = jax.block_until_ready(
        collate_model_forward(x_fm.T, params, sigmoid=True, feature_major=False))
    assert bool(jnp.max(jnp.abs(out2 - ref)) < 1e-2)

    print("KERNEL_OK")
</pallas_src>

<mosaic_0001>
module attributes {stable_mosaic.version = 11 : i64} {
  func.func @_mlp_kernel(%arg0: i32, %arg1: memref<2x512xf32, #tpu.memory_space<vmem>>, %arg2: memref<5x32x32xf32, #tpu.memory_space<vmem>>, %arg3: memref<5x32x1xf32, #tpu.memory_space<vmem>>, %arg4: memref<1x512xf32, #tpu.memory_space<vmem>>) attributes {dimension_semantics = [#tpu.dimension_semantics<parallel>], iteration_bounds = array<i64: 1>, scalar_prefetch = 0 : i64, scratch_operands = 0 : i64, tpu.core_type = #tpu.core_type<tc>, window_params = [{transform_indices = @transform_0, window_bounds = array<i64: 2, 512>}, {pipeline_mode = #tpu.pipeline_mode<synchronous>, transform_indices = @transform_1, window_bounds = array<i64: 5, 32, 32>}, {pipeline_mode = #tpu.pipeline_mode<synchronous>, transform_indices = @transform_2, window_bounds = array<i64: 5, 32, 1>}, {transform_indices = @transform_3, window_bounds = array<i64: 1, 512>}]} {
    %c0 = arith.constant 0 : index
    %c0_0 = arith.constant 0 : index
    %c0_1 = arith.constant 0 : index
    %0 = vector.load %arg2[%c0, %c0_0, %c0_1] : memref<5x32x32xf32, #tpu.memory_space<vmem>>, vector<1x16x1xf32>
    %1 = vector.shape_cast %0 : vector<1x16x1xf32> to vector<16x1xf32>
    %2 = vector.shape_cast %1 : vector<16x1xf32> to vector<16x1xf32>
    %3 = vector.broadcast %2 : vector<16x1xf32> to vector<16x256xf32>
    %c0_2 = arith.constant 0 : index
    %c0_3 = arith.constant 0 : index
    %c1 = arith.constant 1 : index
    %4 = vector.load %arg2[%c0_2, %c0_3, %c1] : memref<5x32x32xf32, #tpu.memory_space<vmem>>, vector<1x16x1xf32>
    %5 = vector.shape_cast %4 : vector<1x16x1xf32> to vector<16x1xf32>
    %6 = vector.shape_cast %5 : vector<16x1xf32> to vector<16x1xf32>
    %7 = vector.broadcast %6 : vector<16x1xf32> to vector<16x256xf32>
    %c0_4 = arith.constant 0 : index
    %c0_5 = arith.constant 0 : index
    %c0_6 = arith.constant 0 : index
    %8 = vector.load %arg3[%c0_4, %c0_5, %c0_6] : memref<5x32x1xf32, #tpu.memory_space<vmem>>, vector<1x16x1xf32>
    %9 = vector.shape_cast %8 : vector<1x16x1xf32> to vector<16x1xf32>
    %10 = vector.shape_cast %9 : vector<16x1xf32> to vector<16x1xf32>
    %11 = vector.broadcast %10 : vector<16x1xf32> to vector<16x256xf32>
    %c1_7 = arith.constant 1 : index
    %c0_8 = arith.constant 0 : index
    %c0_9 = arith.constant 0 : index
    %12 = vector.load %arg2[%c1_7, %c0_8, %c0_9] : memref<5x32x32xf32, #tpu.memory_space<vmem>>, vector<1x32x16xf32>
    %13 = vector.shape_cast %12 : vector<1x32x16xf32> to vector<32x16xf32>
    %c1_10 = arith.constant 1 : index
    %c0_11 = arith.constant 0 : index
    %c0_12 = arith.constant 0 : index
    %14 = vector.load %arg3[%c1_10, %c0_11, %c0_12] : memref<5x32x1xf32, #tpu.memory_space<vmem>>, vector<1x32x1xf32>
    %15 = vector.shape_cast %14 : vector<1x32x1xf32> to vector<32x1xf32>
    %16 = vector.shape_cast %15 : vector<32x1xf32> to vector<32x1xf32>
    %17 = vector.broadcast %16 : vector<32x1xf32> to vector<32x256xf32>
    %c2 = arith.constant 2 : index
    %c0_13 = arith.constant 0 : index
    %c0_14 = arith.constant 0 : index
    %18 = vector.load %arg2[%c2, %c0_13, %c0_14] : memref<5x32x32xf32, #tpu.memory_space<vmem>>, vector<1x16x32xf32>
    %19 = vector.shape_cast %18 : vector<1x16x32xf32> to vector<16x32xf32>
    %c2_15 = arith.constant 2 : index
    %c0_16 = arith.constant 0 : index
    %c0_17 = arith.constant 0 : index
    %20 = vector.load %arg3[%c2_15, %c0_16, %c0_17] : memref<5x32x1xf32, #tpu.memory_space<vmem>>, vector<1x16x1xf32>
    %21 = vector.shape_cast %20 : vector<1x16x1xf32> to vector<16x1xf32>
    %22 = vector.shape_cast %21 : vector<16x1xf32> to vector<16x1xf32>
    %23 = vector.broadcast %22 : vector<16x1xf32> to vector<16x256xf32>
    %c3 = arith.constant 3 : index
    %c0_18 = arith.constant 0 : index
    %c0_19 = arith.constant 0 : index
    %24 = vector.load %arg2[%c3, %c0_18, %c0_19] : memref<5x32x32xf32, #tpu.memory_space<vmem>>, vector<1x8x16xf32>
    %25 = vector.shape_cast %24 : vector<1x8x16xf32> to vector<8x16xf32>
    %c3_20 = arith.constant 3 : index
    %c0_21 = arith.constant 0 : index
    %c0_22 = arith.constant 0 : index
    %26 = vector.load %arg3[%c3_20, %c0_21, %c0_22] : memref<5x32x1xf32, #tpu.memory_space<vmem>>, vector<1x8x1xf32>
    %27 = vector.shape_cast %26 : vector<1x8x1xf32> to vector<8x1xf32>
    %28 = vector.shape_cast %27 : vector<8x1xf32> to vector<8x1xf32>
    %29 = vector.broadcast %28 : vector<8x1xf32> to vector<8x256xf32>
    %c4 = arith.constant 4 : index
    %c0_23 = arith.constant 0 : index
    %c0_24 = arith.constant 0 : index
    %30 = vector.load %arg2[%c4, %c0_23, %c0_24] : memref<5x32x32xf32, #tpu.memory_space<vmem>>, vector<1x8x1xf32>
    %31 = vector.shape_cast %30 : vector<1x8x1xf32> to vector<8x1xf32>
    %32 = vector.shape_cast %31 : vector<8x1xf32> to vector<8x1xf32>
    %33 = vector.broadcast %32 : vector<8x1xf32> to vector<8x256xf32>
    %c4_25 = arith.constant 4 : index
    %c0_26 = arith.constant 0 : index
    %c0_27 = arith.constant 0 : index
    %34 = vector.load %arg3[%c4_25, %c0_26, %c0_27] : memref<5x32x1xf32, #tpu.memory_space<vmem>>, vector<1x1x1xf32>
    %35 = vector.shape_cast %34 : vector<1x1x1xf32> to vector<1x1xf32>
    %36 = vector.shape_cast %35 : vector<1x1xf32> to vector<1x1xf32>
    %37 = vector.broadcast %36 : vector<1x1xf32> to vector<1x256xf32>
    %c0_i32 = arith.constant 0 : i32
    %c2_i32 = arith.constant 2 : i32
    %38 = arith.addi %c0_i32, %c2_i32 : i32
    %c1_i32 = arith.constant 1 : i32
    scf.for %arg5 = %c0_i32 to %38 step %c1_i32  : i32 {
      %c1_i32_29 = arith.constant 1 : i32
      %39 = arith.muli %arg5, %c1_i32_29 : i32
      %c0_i32_30 = arith.constant 0 : i32
      %40 = arith.addi %c0_i32_30, %39 : i32
      %c256_i32 = arith.constant 256 : i32
      %41 = arith.muli %40, %c256_i32 : i32
      %42 = tpu.assume_multiple %41, 256 : i32
      %c0_31 = arith.constant 0 : index
      %43 = arith.index_cast %42 : i32 to index
      %44 = vector.load %arg1[%c0_31, %43] : memref<2x512xf32, #tpu.memory_space<vmem>>, vector<2x256xf32>
      %45 = vector.extract_strided_slice %44 {offsets = [0, 0], sizes = [1, 256], strides = [1, 1]} : vector<2x256xf32> to vector<1x256xf32>
      %46 = vector.broadcast %45 : vector<1x256xf32> to vector<16x256xf32>
      %47 = arith.mulf %3, %46 : vector<16x256xf32>
      %48 = vector.extract_strided_slice %44 {offsets = [1, 0], sizes = [1, 256], strides = [1, 1]} : vector<2x256xf32> to vector<1x256xf32>
      %49 = vector.broadcast %48 : vector<1x256xf32> to vector<16x256xf32>
      %50 = arith.mulf %7, %49 : vector<16x256xf32>
      %51 = arith.addf %47, %50 : vector<16x256xf32>
      %52 = arith.addf %51, %11 : vector<16x256xf32>
      %cst = arith.constant 0.000000e+00 : f32
      %53 = vector.broadcast %cst : f32 to vector<16x256xf32>
      %54 = arith.maximumf %52, %53 : vector<16x256xf32>
      %cst_32 = arith.constant dense<0.000000e+00> : vector<32x256xf32>
      %55 = tpu.matmul %13, %54, %cst_32 {dimension_numbers = #tpu.dot_dimension_numbers<[1], [0], [0], [1], [0, 0, 1, 1], [], []>} : vector<32x16xf32>, vector<16x256xf32>, vector<32x256xf32> -> vector<32x256xf32>
      %56 = arith.addf %55, %17 : vector<32x256xf32>
      %cst_33 = arith.constant 0.000000e+00 : f32
      %57 = vector.broadcast %cst_33 : f32 to vector<32x256xf32>
      %58 = arith.maximumf %56, %57 : vector<32x256xf32>
      %cst_34 = arith.constant dense<0.000000e+00> : vector<16x256xf32>
      %59 = tpu.matmul %19, %58, %cst_34 {dimension_numbers = #tpu.dot_dimension_numbers<[1], [0], [0], [1], [0, 0, 1, 1], [], []>} : vector<16x32xf32>, vector<32x256xf32>, vector<16x256xf32> -> vector<16x256xf32>
      %60 = arith.addf %59, %23 : vector<16x256xf32>
      %cst_35 = arith.constant 0.000000e+00 : f32
      %61 = vector.broadcast %cst_35 : f32 to vector<16x256xf32>
      %62 = arith.maximumf %60, %61 : vector<16x256xf32>
      %cst_36 = arith.constant dense<0.000000e+00> : vector<8x256xf32>
      %63 = tpu.matmul %25, %62, %cst_36 {dimension_numbers = #tpu.dot_dimension_numbers<[1], [0], [0], [1], [0, 0, 1, 1], [], []>} : vector<8x16xf32>, vector<16x256xf32>, vector<8x256xf32> -> vector<8x256xf32>
      %64 = arith.addf %63, %29 : vector<8x256xf32>
      %cst_37 = arith.constant 0.000000e+00 : f32
      %65 = vector.broadcast %cst_37 : f32 to vector<8x256xf32>
      %66 = arith.maximumf %64, %65 : vector<8x256xf32>
      %67 = arith.mulf %66, %33 : vector<8x256xf32>
      %cst_38 = arith.constant dense<0.000000e+00> : vector<256xf32>
      %68 = vector.multi_reduction <add>, %67, %cst_38 [0] : vector<8x256xf32> to vector<256xf32>
      %69 = vector.shape_cast %68 : vector<256xf32> to vector<1x256xf32>
      %70 = arith.addf %69, %37 : vector<1x256xf32>
      %cst_39 = arith.constant 0.000000e+00 : f32
      %71 = vector.broadcast %cst_39 : f32 to vector<1x256xf32>
      %72 = arith.subf %71, %70 : vector<1x256xf32>
      %73 = math.exp %72 : vector<1x256xf32>
      %cst_40 = arith.constant 1.000000e+00 : f32
      %74 = vector.broadcast %cst_40 : f32 to vector<1x256xf32>
      %75 = arith.addf %74, %73 : vector<1x256xf32>
      %76 = tpu.reciprocal %75 {approx = true} : vector<1x256xf32> -> vector<1x256xf32>
      %c0_41 = arith.constant 0 : index
      %77 = arith.index_cast %42 : i32 to index
      %78 = vector.load %arg4[%c0_41, %77] : memref<1x512xf32, #tpu.memory_space<vmem>>, vector<1x256xf32>
      tpu.vector_store %arg4[%c0_41, %77], %76 {strides = array<i32>} : memref<1x512xf32, #tpu.memory_space<vmem>>, vector<1x256xf32>,
    }
    %c2_i32_28 = arith.constant 2 : i32
    return
  }
  func.func @transform_0(%arg0: i32) -> (i32, i32) {
    %c0_i32 = arith.constant 0 : i32
    %c0_i32_0 = arith.constant 0 : i32
    return %c0_i32, %arg0 : i32, i32
  }
  func.func @transform_1(%arg0: i32) -> (i32, i32, i32) {
    %c0_i32 = arith.constant 0 : i32
    %c0_i32_0 = arith.constant 0 : i32
    %c0_i32_1 = arith.constant 0 : i32
    %c0_i32_2 = arith.constant 0 : i32
    return %c0_i32, %c0_i32_0, %c0_i32_1 : i32, i32, i32
  }
  func.func @transform_2(%arg0: i32) -> (i32, i32, i32) {
    %c0_i32 = arith.constant 0 : i32
    %c0_i32_0 = arith.constant 0 : i32
    %c0_i32_1 = arith.constant 0 : i32
    %c0_i32_2 = arith.constant 0 : i32
    return %c0_i32, %c0_i32_0, %c0_i32_1 : i32, i32, i32
  }
  func.func @transform_3(%arg0: i32) -> (i32, i32) {
    %c0_i32 = arith.constant 0 : i32
    %c0_i32_0 = arith.constant 0 : i32
    return %c0_i32, %arg0 : i32, i32
  }
}

</mosaic_0001>

<llo_original>
// kernel: tpu_custom_call.1
$region0: #{tpu_custom_call.1}
  #allocation0 [shape = 'u32[]', space=smem, size = 0x4, offset = 0x4, fixed_abs, tag = 'smem constant byte address 0x4 - core index']
  #allocation1 [shape = 'u32[144,128]{1,0:T(1,128)}', space=vmem, size = 0x12000, scoped, tag = 'internal scratch']
  %s0 = inlined_call_operand.vmem [shape: f32[2,512], index: 0, kind: input, shape index: {}]
  %s1 = inlined_call_operand.vmem [shape: f32[5,32,32], index: 1, kind: input, shape index: {}]
  %s2 = inlined_call_operand.vmem [shape: f32[5,32,1], index: 2, kind: input, shape index: {}]
  %s3 = inlined_call_operand.hbm [shape: f32[1,512], index: 3, kind: output, shape index: {}]
  %s4 = sld [smem:[#allocation0]]
  $region29: #{tpu_custom_call.1} parent=0
    _
  %s6 = ssub.s32 1, %s4
  %s7 = scalar_select 0, %s6, %s4
  $region1: #{tpu_custom_call.1} parent=0
    #allocation2 [shape = 'u8[2048]{0}', space=vmem, size = 0x800, scoped, tag = 'output window, operand 0, single buffered']
    #allocation3 [shape = 's32[1]{0}', space=sflag, size = 0x4, scoped, tag = 'scoped memory for tpu_custom_call.1']
    %8 = vsyncpa [#allocation3], 0
    // Predicated region
    $region2: #{tpu_custom_call.1} parent=1 // pred_check
      _
    $region3: #{tpu_custom_call.1} parent=1 // pred_check_branch
      %10 = sbr.rel (0) target = $region5
    $region4: #{tpu_custom_call.1} parent=1 // pred_region
      _
    $region5: #{tpu_custom_call.1} parent=1 // pred_fallthru
      _
    // Predicated region
    $region6: #{tpu_custom_call.1} parent=1 // pred_check
      _
    $region7: #{tpu_custom_call.1} parent=1 // pred_check_branch
      %12 = sbr.rel (0) target = $region9
    $region8: #{tpu_custom_call.1} parent=1 // pred_region
      _
    $region9: #{tpu_custom_call.1} parent=1 // pred_fallthru
      _
    // Predicated region
    $region10: #{tpu_custom_call.1} parent=1 // pred_check
      _
    $region11: #{tpu_custom_call.1} parent=1 // pred_check_branch
      %14 = sbr.rel (0) target = $region13
    $region12: #{tpu_custom_call.1} parent=1 // pred_region
      _
    $region13: #{tpu_custom_call.1} parent=1 // pred_fallthru
      _
    %v15 = vld [vmem:[%s1] sm:$0xff]
    %v16 = vld [vmem:[%s1 + $0x8] sm:$0xff]
    %18 = vset.pattern.permute.xlu0 0
    %19 = vperm.xlu0 %18, %v15
    %v20 = vpop.permute.xlu0 %19
    %23 = vset.pattern.permute.xlu0 0
    %24 = vperm.xlu0 %23, %v16
    %v25 = vpop.permute.xlu0 %24
    %27 = vset.pattern.permute.xlu0 1
    %28 = vperm.xlu0 %27, %v15
    %v29 = vpop.permute.xlu0 %28
    %31 = vset.pattern.permute.xlu0 1
    %32 = vperm.xlu0 %31, %v16
    %v33 = vpop.permute.xlu0 %32
    %v35 = vld [vmem:[%s2] sm:$0xff]
    %v36 = vld [vmem:[%s2 + $0x8] sm:$0xff]
    %38 = vset.pattern.permute.xlu0 0
    %39 = vperm.xlu0 %38, %v35
    %v40 = vpop.permute.xlu0 %39
    %43 = vset.pattern.permute.xlu0 0
    %44 = vperm.xlu0 %43, %v36
    %v45 = vpop.permute.xlu0 %44
    %s47 = scalar_lea.vmem %s1, 32
    %v48 = vld [vmem:[%s47] sm:$0xff]
    %v49 = vld [vmem:[%s47 + $0x8] sm:$0xff]
    %v50 = vld [vmem:[%s47 + $0x10] sm:$0xff]
    %v51 = vld [vmem:[%s47 + $0x18] sm:$0xff]
    %s52 = scalar_lea.vmem %s2, 32
    %v53 = vld [vmem:[%s52] sm:$0xff]
    %v54 = vld [vmem:[%s52 + $0x8] sm:$0xff]
    %v55 = vld [vmem:[%s52 + $0x10] sm:$0xff]
    %v56 = vld [vmem:[%s52 + $0x18] sm:$0xff]
    %58 = vset.pattern.permute.xlu0 0
    %59 = vperm.xlu0 %58, %v53
    %v60 = vpop.permute.xlu0 %59
    %63 = vset.pattern.permute.xlu0 0
    %64 = vperm.xlu0 %63, %v54
    %v65 = vpop.permute.xlu0 %64
    %68 = vset.pattern.permute.xlu0 0
    %69 = vperm.xlu0 %68, %v55
    %v70 = vpop.permute.xlu0 %69
    %73 = vset.pattern.permute.xlu0 0
    %74 = vperm.xlu0 %73, %v56
    %v75 = vpop.permute.xlu0 %74
    %s77 = scalar_lea.vmem %s1, 64
    %v78 = vld [vmem:[%s77] sm:$0xff]
    %v79 = vld [vmem:[%s77 + $0x8] sm:$0xff]
    %s80 = scalar_lea.vmem %s2, 64
    %v81 = vld [vmem:[%s80] sm:$0xff]
    %v82 = vld [vmem:[%s80 + $0x8] sm:$0xff]
    %84 = vset.pattern.permute.xlu0 0
    %85 = vperm.xlu0 %84, %v81
    %v86 = vpop.permute.xlu0 %85
    %89 = vset.pattern.permute.xlu0 0
    %90 = vperm.xlu0 %89, %v82
    %v91 = vpop.permute.xlu0 %90
    %s93 = scalar_lea.vmem %s1, 96
    %v94 = vld [vmem:[%s93] sm:$0xff]
    %s95 = scalar_lea.vmem %s2, 96
    %v96 = vld [vmem:[%s95] sm:$0xff]
    %98 = vset.pattern.permute.xlu0 0
    %99 = vperm.xlu0 %98, %v96
    %v100 = vpop.permute.xlu0 %99
    %s102 = scalar_lea.vmem %s1, 128
    %v103 = vld [vmem:[%s102] sm:$0xff]
    %105 = vset.pattern.permute.xlu0 0
    %106 = vperm.xlu0 %105, %v103
    %v107 = vpop.permute.xlu0 %106
    %s109 = scalar_lea.vmem %s2, 128
    %v110 = vld [vmem:[%s109] sm:$0x1]
    %112 = vset.pattern.permute.xlu0 0
    %113 = vperm.xlu0 %112, %v110
    %v114 = vpop.permute.xlu0 %113
    loop: start=0, step=1, limit=2
    $region14: #{tpu_custom_call.1} parent=1 // loop_pre_header
      _
    $region15: #{tpu_custom_call.1} parent=1 // loop_header
      %s117 = sphi 0, %s121
      %p118 = scmp.ge.s32.totalorder %s117, 2
    $region16: #{tpu_custom_call.1} parent=1 // loop_header_branch
      %120 = sbr.rel (%p118) target = $region20
    $region17: #{tpu_custom_call.1} parent=1 // loop_body
      %s122 = smul.u32 %s117, 256
      %s123 = sshra.s32 %s122, 7
      %s124 = sand.u32 %s122, 127
      %s125 = smul.addr %s123, 2
      %s126 = scalar_lea.vmem %s0, %s125
      %v127 = vld [vmem:[%s126] sm:$0xf]
      %v129 = vlaneseq
      %v130 = vshrl.u32 %v129, 7
      %v131 = vsub.s32 0, %v130
      %v132 = vrot.slane %v127, %v131
      %v133 = vlaneseq
      %v134 = vshrl.u32 %v133, 7
      %v135 = vsub.s32 2, %v134
      %v136 = vrot.slane %v127, %v135
      %v139 = vlaneseq
      %v140 = vshrl.u32 %v139, 7
      %v141 = vsub.s32 0, %v140
      %v142 = vrot.slane %v132, %v141
      %v143 = vlaneseq
      %v144 = vshrl.u32 %v143, 7
      %v145 = vsub.s32 0, %v144
      %v146 = vrot.slane %v136, %v145
      %v147 = vmul.f32 %v20, %v142
      %v148 = vmul.f32 %v20, %v146
      %v149 = vmul.f32 %v25, %v142
      %v150 = vmul.f32 %v25, %v146
      %v151 = vlaneseq
      %v152 = vshrl.u32 %v151, 7
      %v153 = vsub.s32 1, %v152
      %v154 = vrot.slane %v127, %v153
      %v155 = vlaneseq
      %v156 = vshrl.u32 %v155, 7
      %v157 = vsub.s32 3, %v156
      %v158 = vrot.slane %v127, %v157
      %v161 = vlaneseq
      %v162 = vshrl.u32 %v161, 7
      %v163 = vsub.s32 1, %v162
      %v164 = vrot.slane %v154, %v163
      %v165 = vlaneseq
      %v166 = vshrl.u32 %v165, 7
      %v167 = vsub.s32 1, %v166
      %v168 = vrot.slane %v158, %v167
      %v169 = vmul.f32 %v29, %v164
      %v170 = vmul.f32 %v29, %v168
      %v171 = vmul.f32 %v33, %v164
      %v172 = vmul.f32 %v33, %v168
      %v173 = vadd.f32 %v147, %v169
      %v174 = vadd.f32 %v148, %v170
      %v175 = vadd.f32 %v149, %v171
      %v176 = vadd.f32 %v150, %v172
      %v177 = vadd.f32 %v173, %v40
      %v178 = vadd.f32 %v174, %v40
      %v179 = vadd.f32 %v175, %v45
      %v180 = vadd.f32 %v176, %v45
      %v181 = vmax.f32 %v177, 0.0
      %v182 = vmax.f32 %v178, 0.0
      %v183 = vmax.f32 %v179, 0.0
      %v184 = vmax.f32 %v180, 0.0
      %vm185 = vcmask 130048
      %v187 = vsel %vm185, %v48, 0
      %v190 = vsel %vm185, %v49, 0
      %v193 = vsel %vm185, %v50, 0
      %v196 = vsel %vm185, %v51, 0
      %198 = vmatprep.subr.mxu0 %v182
      %199 = vmatpush1.msra.mxu0 %v181
      %200 = vmatprep.subr.mxu0 %v184
      %201 = vmatpush1.msra.mxu0 %v183
      %202 = vmatprep.subr.mxu0 0.0
      %203 = vmatpush1.msra.mxu0 0.0
      %204 = vmatprep.subr.mxu0 0.0
      %205 = vmatpush1.msra.mxu0 0.0
      %206 = vmatprep.subr.mxu0 0.0
      %207 = vmatpush1.msra.mxu0 0.0
      %208 = vmatprep.subr.mxu0 0.0
      %209 = vmatpush1.msra.mxu0 0.0
      %210 = vmatprep.subr.mxu0 0.0
      %211 = vmatpush1.msra.mxu0 0.0
      %212 = vmatprep.subr.mxu0 0.0
      %213 = vmatpush1.msra.mxu0 0.0
      %214 = vmatprep.subr.mxu0 0.0
      %215 = vmatpush1.msra.mxu0 0.0
      %216 = vmatprep.subr.mxu0 0.0
      %217 = vmatpush1.msra.mxu0 0.0
      %218 = vmatprep.subr.mxu0 0.0
      %219 = vmatpush1.msra.mxu0 0.0
      %220 = vmatprep.subr.mxu0 0.0
      %221 = vmatpush1.msra.mxu0 0.0
      %222 = vmatprep.subr.mxu0 0.0
      %223 = vmatpush1.msra.mxu0 0.0
      %224 = vmatprep.subr.mxu0 0.0
      %225 = vmatpush1.msra.mxu0 0.0
      %226 = vmatprep.subr.mxu0 0.0
      %227 = vmatpush1.msra.mxu0 0.0
      %228 = vmatprep.subr.mxu0 0.0
      %229 = vmatpush1.msra.mxu0 0.0
      %230 = vmatprep.subr.mxu0 0.0
      %231 = vmatpush1.msra.mxu0 0.0
      %232 = vmatprep.subr.mxu0 0.0
      %233 = vmatpush1.msra.mxu0 0.0
      %234 = vmatprep.subr.mxu0 0.0
      %235 = vmatpush1.msra.mxu0 0.0
      %236 = vmatprep.subr.mxu0 0.0
      %237 = vmatpush1.msra.mxu0 0.0
      %238 = vmatprep.subr.mxu0 0.0
      %239 = vmatpush1.msra.mxu0 0.0
      %240 = vmatprep.subr.mxu0 0.0
      %241 = vmatpush1.msra.mxu0 0.0
      %242 = vmatprep.subr.mxu0 0.0
      %243 = vmatpush1.msra.mxu0 0.0
      %244 = vmatprep.subr.mxu0 0.0
      %245 = vmatpush1.msra.mxu0 0.0
      %246 = vmatprep.subr.mxu0 0.0
      %247 = vmatpush1.msra.mxu0 0.0
      %248 = vmatprep.subr.mxu0 0.0
      %249 = vmatpush1.msra.mxu0 0.0
      %250 = vmatprep.subr.mxu0 0.0
      %251 = vmatpush1.msra.mxu0 0.0
      %252 = vmatprep.subr.mxu0 0.0
      %253 = vmatpush1.msra.mxu0 0.0
      %254 = vmatprep.subr.mxu0 0.0
      %255 = vmatpush1.msra.mxu0 0.0
      %256 = vmatprep.subr.mxu0 0.0
      %257 = vmatpush1.msra.mxu0 0.0
      %258 = vmatprep.subr.mxu0 0.0
      %259 = vmatpush1.msra.mxu0 0.0
      %260 = vmatprep.subr.mxu0 0.0
      %261 = vmatpush1.msra.mxu0 0.0
      %262 = vmatprep.mubr.f32.mxu0 0.0
      %263 = vmatmul.mubr.f32.gmra.mrb[0].mxu0 %v187
      %v264 = vpop.f32.mrb[0].mxu0
      %v265 = vadd.f32 %v60, %v264
      %v266 = vpop.f32.mrb[0].mxu0
      %v267 = vadd.f32 %v60, %v266
      %268 = vmatprep.mubr.f32.mxu0 0.0
      %269 = vmatmul.mubr.f32.gmra.mrb[0].mxu0 %v190
      %v270 = vpop.f32.mrb[0].mxu0
      %v271 = vadd.f32 %v65, %v270
      %v272 = vpop.f32.mrb[0].mxu0
      %v273 = vadd.f32 %v65, %v272
      %274 = vmatprep.mubr.f32.mxu0 0.0
      %275 = vmatmul.mubr.f32.gmra.mrb[0].mxu0 %v193
      %v276 = vpop.f32.mrb[0].mxu0
      %v277 = vadd.f32 %v70, %v276
      %v278 = vpop.f32.mrb[0].mxu0
      %v279 = vadd.f32 %v70, %v278
      %280 = vmatprep.mubr.f32.mxu0 0.0
      %281 = vmatmul.mubr.f32.gmra.mrb[0].mxu0 %v196
      %v282 = vpop.f32.mrb[0].mxu0
      %v283 = vadd.f32 %v75, %v282
      %v284 = vpop.f32.mrb[0].mxu0
      %v285 = vadd.f32 %v75, %v284
      %286 = vdwg.mxu0
      %v287 = vmax.f32 %v265, 0.0
      %v288 = vmax.f32 %v267, 0.0
      %v289 = vmax.f32 %v271, 0.0
      %v290 = vmax.f32 %v273, 0.0
      %v291 = vmax.f32 %v277, 0.0
      %v292 = vmax.f32 %v279, 0.0
      %v293 = vmax.f32 %v283, 0.0
      %v294 = vmax.f32 %v285, 0.0
      %vm295 = vcmask 261120
      %v297 = vsel %vm295, %v78, 0
      %v300 = vsel %vm295, %v79, 0
      %302 = vmatprep.subr.mxu0 %v288
      %303 = vmatpush1.msra.mxu0 %v287
      %304 = vmatprep.subr.mxu0 %v290
      %305 = vmatpush1.msra.mxu0 %v289
      %306 = vmatprep.subr.mxu0 %v292
      %307 = vmatpush1.msra.mxu0 %v291
      %308 = vmatprep.subr.mxu0 %v294
      %309 = vmatpush1.msra.mxu0 %v293
      %310 = vmatprep.subr.mxu0 0.0
      %311 = vmatpush1.msra.mxu0 0.0
      %312 = vmatprep.subr.mxu0 0.0
      %313 = vmatpush1.msra.mxu0 0.0
      %314 = vmatprep.subr.mxu0 0.0
      %315 = vmatpush1.msra.mxu0 0.0
      %316 = vmatprep.subr.mxu0 0.0
      %317 = vmatpush1.msra.mxu0 0.0
      %318 = vmatprep.subr.mxu0 0.0
      %319 = vmatpush1.msra.mxu0 0.0
      %320 = vmatprep.subr.mxu0 0.0
      %321 = vmatpush1.msra.mxu0 0.0
      %322 = vmatprep.subr.mxu0 0.0
      %323 = vmatpush1.msra.mxu0 0.0
      %324 = vmatprep.subr.mxu0 0.0
      %325 = vmatpush1.msra.mxu0 0.0
      %326 = vmatprep.subr.mxu0 0.0
      %327 = vmatpush1.msra.mxu0 0.0
      %328 = vmatprep.subr.mxu0 0.0
      %329 = vmatpush1.msra.mxu0 0.0
      %330 = vmatprep.subr.mxu0 0.0
      %331 = vmatpush1.msra.mxu0 0.0
      %332 = vmatprep.subr.mxu0 0.0
      %333 = vmatpush1.msra.mxu0 0.0
      %334 = vmatprep.subr.mxu0 0.0
      %335 = vmatpush1.msra.mxu0 0.0
      %336 = vmatprep.subr.mxu0 0.0
      %337 = vmatpush1.msra.mxu0 0.0
      %338 = vmatprep.subr.mxu0 0.0
      %339 = vmatpush1.msra.mxu0 0.0
      %340 = vmatprep.subr.mxu0 0.0
      %341 = vmatpush1.msra.mxu0 0.0
      %342 = vmatprep.subr.mxu0 0.0
      %343 = vmatpush1.msra.mxu0 0.0
      %344 = vmatprep.subr.mxu0 0.0
      %345 = vmatpush1.msra.mxu0 0.0
      %346 = vmatprep.subr.mxu0 0.0
      %347 = vmatpush1.msra.mxu0 0.0
      %348 = vmatprep.subr.mxu0 0.0
      %349 = vmatpush1.msra.mxu0 0.0
      %350 = vmatprep.subr.mxu0 0.0
      %351 = vmatpush1.msra.mxu0 0.0
      %352 = vmatprep.subr.mxu0 0.0
      %353 = vmatpush1.msra.mxu0 0.0
      %354 = vmatprep.subr.mxu0 0.0
      %355 = vmatpush1.msra.mxu0 0.0
      %356 = vmatprep.subr.mxu0 0.0
      %357 = vmatpush1.msra.mxu0 0.0
      %358 = vmatprep.subr.mxu0 0.0
      %359 = vmatpush1.msra.mxu0 0.0
      %360 = vmatprep.subr.mxu0 0.0
      %361 = vmatpush1.msra.mxu0 0.0
      %362 = vmatprep.subr.mxu0 0.0
      %363 = vmatpush1.msra.mxu0 0.0
      %364 = vmatprep.subr.mxu0 0.0
      %365 = vmatpush1.msra.mxu0 0.0
      %366 = vmatprep.mubr.f32.mxu0 0.0
      %367 = vmatmul.mubr.f32.gmra.mrb[0].mxu0 %v297
      %v368 = vpop.f32.mrb[0].mxu0
      %v369 = vadd.f32 %v86, %v368
      %v370 = vpop.f32.mrb[0].mxu0
      %v371 = vadd.f32 %v86, %v370
      %372 = vmatprep.mubr.f32.mxu0 0.0
      %373 = vmatmul.mubr.f32.gmra.mrb[0].mxu0 %v300
      %v374 = vpop.f32.mrb[0].mxu0
      %v375 = vadd.f32 %v91, %v374
      %v376 = vpop.f32.mrb[0].mxu0
      %v377 = vadd.f32 %v91, %v376
      %378 = vdwg.mxu0
      %v379 = vmax.f32 %v369, 0.0
      %v380 = vmax.f32 %v371, 0.0
      %v381 = vmax.f32 %v375, 0.0
      %v382 = vmax.f32 %v377, 0.0
      %v384 = vsel %vm185, %v94, 0
      %386 = vmatprep.subr.mxu0 %v380
      %387 = vmatpush1.msra.mxu0 %v379
      %388 = vmatprep.subr.mxu0 %v382
      %389 = vmatpush1.msra.mxu0 %v381
      %390 = vmatprep.subr.mxu0 0.0
      %391 = vmatpush1.msra.mxu0 0.0
      %392 = vmatprep.subr.mxu0 0.0
      %393 = vmatpush1.msra.mxu0 0.0
      %394 = vmatprep.subr.mxu0 0.0
      %395 = vmatpush1.msra.mxu0 0.0
      %396 = vmatprep.subr.mxu0 0.0
      %397 = vmatpush1.msra.mxu0 0.0
      %398 = vmatprep.subr.mxu0 0.0
      %399 = vmatpush1.msra.mxu0 0.0
      %400 = vmatprep.subr.mxu0 0.0
      %401 = vmatpush1.msra.mxu0 0.0
      %402 = vmatprep.subr.mxu0 0.0
      %403 = vmatpush1.msra.mxu0 0.0
      %404 = vmatprep.subr.mxu0 0.0
      %405 = vmatpush1.msra.mxu0 0.0
      %406 = vmatprep.subr.mxu0 0.0
      %407 = vmatpush1.msra.mxu0 0.0
      %408 = vmatprep.subr.mxu0 0.0
      %409 = vmatpush1.msra.mxu0 0.0
      %410 = vmatprep.subr.mxu0 0.0
      %411 = vmatpush1.msra.mxu0 0.0
      %412 = vmatprep.subr.mxu0 0.0
      %413 = vmatpush1.msra.mxu0 0.0
      %414 = vmatprep.subr.mxu0 0.0
      %415 = vmatpush1.msra.mxu0 0.0
      %416 = vmatprep.subr.mxu0 0.0
      %417 = vmatpush1.msra.mxu0 0.0
      %418 = vmatprep.subr.mxu0 0.0
      %419 = vmatpush1.msra.mxu0 0.0
      %420 = vmatprep.subr.mxu0 0.0
      %421 = vmatpush1.msra.mxu0 0.0
      %422 = vmatprep.subr.mxu0 0.0
      %423 = vmatpush1.msra.mxu0 0.0
      %424 = vmatprep.subr.mxu0 0.0
      %425 = vmatpush1.msra.mxu0 0.0
      %426 = vmatprep.subr.mxu0 0.0
      %427 = vmatpush1.msra.mxu0 0.0
      %428 = vmatprep.subr.mxu0 0.0
      %429 = vmatpush1.msra.mxu0 0.0
      %430 = vmatprep.subr.mxu0 0.0
      %431 = vmatpush1.msra.mxu0 0.0
      %432 = vmatprep.subr.mxu0 0.0
      %433 = vmatpush1.msra.mxu0 0.0
      %434 = vmatprep.subr.mxu0 0.0
      %435 = vmatpush1.msra.mxu0 0.0
      %436 = vmatprep.subr.mxu0 0.0
      %437 = vmatpush1.msra.mxu0 0.0
      %438 = vmatprep.subr.mxu0 0.0
      %439 = vmatpush1.msra.mxu0 0.0
      %440 = vmatprep.subr.mxu0 0.0
      %441 = vmatpush1.msra.mxu0 0.0
      %442 = vmatprep.subr.mxu0 0.0
      %443 = vmatpush1.msra.mxu0 0.0
      %444 = vmatprep.subr.mxu0 0.0
      %445 = vmatpush1.msra.mxu0 0.0
      %446 = vmatprep.subr.mxu0 0.0
      %447 = vmatpush1.msra.mxu0 0.0
      %448 = vmatprep.subr.mxu0 0.0
      %449 = vmatpush1.msra.mxu0 0.0
      %450 = vmatprep.mubr.f32.mxu0 0.0
      %451 = vmatmul.mubr.f32.gmra.mrb[0].mxu0 %v384
      %v452 = vpop.f32.mrb[0].mxu0
      %v453 = vadd.f32 %v100, %v452
      %v454 = vpop.f32.mrb[0].mxu0
      %v455 = vadd.f32 %v100, %v454
      %456 = vdwg.mxu0
      %v457 = vmax.f32 %v453, 0.0
      %v458 = vmax.f32 %v455, 0.0
      %v459 = vmul.f32 %v457, %v107
      %v460 = vmul.f32 %v458, %v107
      %v461 = vrot.slane %v459, 4
      %v462 = vadd.f32 %v459, %v461
      %v463 = vrot.slane %v462, 2
      %v464 = vadd.f32 %v462, %v463
      %v465 = vrot.slane %v464, 1
      %v466 = vadd.f32 %v464, %v465
      %v467 = vrot.slane %v460, 4
      %v468 = vadd.f32 %v460, %v467
      %v469 = vrot.slane %v468, 2
      %v470 = vadd.f32 %v468, %v469
      %v471 = vrot.slane %v470, 1
      %v472 = vadd.f32 %v470, %v471
      %v473 = vadd.f32 %v466, %v114
      %v474 = vadd.f32 %v472, %v114
      %v475 = vsub.f32 0.0, %v473
      %v476 = vsub.f32 0.0, %v474
      %v477 = vmul.f32 %v475, 1.442695
      %v478 = vpow.pop %v477
      %v479 = vmul.f32 %v476, 1.442695
      %v480 = vpow.pop %v479
      %v481 = vadd.f32 %v478, 1.0
      %v482 = vadd.f32 %v480, 1.0
      %v483 = vrcp.pop %v481
      %v484 = vrcp.pop %v482
      %v487 = vcombine.low %v483, %v484
      %v489 = vunpack.c.l.s4 1966171168
      %v490 = vunpack.c.0.s8 %v489
      %v491 = vlaneseq
      %v492 = vshrl.u32 %v491, 7
      %v493 = vsub.s32 %v490, %v492
      %v494 = vrot.slane %v487, %v493
      %v496 = vunpack.c.l.s4 1966171168
      %v497 = vunpack.c.0.s8 %v496
      %v498 = vlaneseq
      %v499 = vshrl.u32 %v498, 7
      %v500 = vsub.s32 %v497, %v499
      %v501 = vrot.slane %v494, %v500
      %s503 = scalar_lea.vmem [#allocation2], %s123
      %v504 = vlaneseq
      %vm505 = vcmp.ge.s32.totalorder %v504, 0
      %vm506 = vcmp.lt.s32.totalorder %v504, 256
      %vm507 = vmand %vm505, %vm506
      %508 = vst.msk [vmem:[%s503] sm:$0x3] %vm507, %v501
    $region18: #{tpu_custom_call.1} parent=1 // loop_footer
      %s121 = sadd.s32 1, %s117
    $region19: #{tpu_custom_call.1} parent=1 // loop_footer_branch
      %116 = sbr.rel target = $region15
    $region20: #{tpu_custom_call.1} parent=1 // loop_exit
      _
    // Predicated region
    $region21: #{tpu_custom_call.1} parent=1 // pred_check
      _
    $region22: #{tpu_custom_call.1} parent=1 // pred_check_branch
      %510 = sbr.rel (0) target = $region24
    $region23: #{tpu_custom_call.1} parent=1 // pred_region
      %s512 = ssub.s32 64, 64
      %513 = vsyncadd [#allocation3], %s512
      %s515 = sshll.u32 [#allocation2], 4
      %s516 = int_to_ptr.vmem [resolvable:$true] %s515
      %518 = dma.vmem_to_hbm [thread:$0]  %s516, 64, %s3, [#allocation3]
    $region24: #{tpu_custom_call.1} parent=1 // pred_fallthru
      _
    // Predicated region
    $region25: #{tpu_custom_call.1} parent=1 // pred_check
      _
    $region26: #{tpu_custom_call.1} parent=1 // pred_check_branch
      %520 = sbr.rel (0) target = $region28
    $region27: #{tpu_custom_call.1} parent=1 // pred_region
      %521 = dma.done [#allocation3], 64
    $region28: #{tpu_custom_call.1} parent=1 // pred_fallthru
      _
    %522 = vsyncpa [#allocation3], 1

</llo_original>
